<compile_context>
chip_gen: v7x
topology: tpu7x:2x2x1
jax: 0.10.0
libtpu: 0.0.40
codegen_flags: <defaults>
</compile_context>

<pallas_src>
import jax
import jax.numpy as jnp
from jax.experimental import pallas as pl
from jax.experimental.pallas import tpu as pltpu


_SQRT_2_OVER_PI = 0.7978845608028654


def _gelu_tanh(x):
    # PyTorch gelu(approximate='tanh'):
    # 0.5 * x * (1 + tanh(sqrt(2/pi) * (x + 0.044715 * x^3)))
    return 0.5 * x * (1.0 + jnp.tanh(_SQRT_2_OVER_PI * (x + 0.044715 * x * x * x)))


# ----------------------------------------------------------------------------- kernel
def gemma_mlp_kernel(x_ref, wgu_ref, wd_ref, o_ref, acc_ref):
    """One (tm, ti) step: fused gate/up matmul, GELU*up, partial down-proj.

    x_ref   : (tm, H)        activation tile
    wgu_ref : (H, 2*ti)      fused [gate_tile | up_tile] weight block (contiguous)
    wd_ref  : (ti, H)        down-proj weight block
    o_ref   : (tm, H)        output tile (written on last reduction step)
    acc_ref : (tm, H) f32    VMEM accumulator, resident across the i axis
    """
    i = pl.program_id(1)

    @pl.when(i == 0)
    def _():
        acc_ref[...] = jnp.zeros_like(acc_ref)

    x = x_ref[...]                                                       # (tm, H)
    # Single MXU matmul of width 2*ti producing both gate and up projections.
    gu = jnp.dot(x, wgu_ref[...], preferred_element_type=jnp.float32)    # (tm, 2*ti)
    ti = gu.shape[-1] // 2
    gate = gu[:, :ti]                                                    # lane-aligned
    up = gu[:, ti:]
    h = _gelu_tanh(gate) * up                                            # f32 (tm, ti)
    # Partial down projection, accumulated in f32.
    acc_ref[...] += jnp.dot(h.astype(wd_ref.dtype), wd_ref[...],
                            preferred_element_type=jnp.float32)

    @pl.when(i == pl.num_programs(1) - 1)
    def _():
        o_ref[...] = acc_ref[...].astype(o_ref.dtype)


# ----------------------------------------------------------------------- tile selection
def _round_up(v, a):
    return -(-v // a) * a


def _vmem_capacity_bytes():
    """Physical VMEM per TensorCore; safe 64-MiB floor if the query fails."""
    try:
        cap = int(pltpu.get_tpu_info().vmem_capacity_bytes)
        if cap > 0:
            return cap
    except Exception:
        pass
    return 64 * 1024 * 1024


def _largest_aligned_divisor(dim, target, align):
    """Largest multiple of `align` that divides `dim` and is <= target.

    Falls back to `dim` itself (block == full array also satisfies the tiling
    rule) when no aligned divisor <= target exists.
    """
    t = min(target, dim)
    t = (t // align) * align
    while t >= align:
        if dim % t == 0:
            return t
        t -= align
    return dim


def _next_smaller_aligned_divisor(dim, cur, align):
    c = cur - align
    while c >= align:
        if dim % c == 0:
            return c
        c -= align
    return cur


def _sublane_floor(dtype):
    # (8,128) f32 / (16,128) bf16 / (32,128) int8-fp8 packing tiles.
    return {4: 8, 2: 16, 1: 32}.get(jnp.dtype(dtype).itemsize, 8)


def _pick_tm(M, floor, target):
    """Largest floor-aligned tm <= target; prefer an exact divisor of M so the
    token-tail pad (extra HBM round trip) is avoided."""
    cap = min(target, _round_up(max(M, 1), floor))
    cap = max(cap, floor)
    c = (cap // floor) * floor
    best_div = 0
    while c >= floor:
        if M % c == 0:
            best_div = c
            break
        c -= floor
    if best_div >= min(128, cap):      # good divisor: no pad, MXU still well fed
        return best_div
    return cap                          # pad the tail rather than starve the MXU


def _vmem_needed(tm, ti, H, x_bytes, o_bytes, w_bytes):
    return (2 * tm * H * x_bytes            # double-buffered x tiles
            + 2 * H * (2 * ti) * w_bytes    # double-buffered fused gate/up tiles
            + 2 * ti * H * w_bytes          # double-buffered down-proj tiles
            + 2 * tm * H * o_bytes          # double-buffered output tiles
            + tm * H * 4)                   # f32 accumulator scratch


def select_gemma_mlp_tiles(M, H, I, x_dtype, w_dtype, vmem_cap=None):
    """Generation-aware (tm, ti, vmem_limit_bytes) selection."""
    if vmem_cap is None:
        vmem_cap = _vmem_capacity_bytes()
    budget = int(0.8 * vmem_cap)            # ~20% headroom for Mosaic scratch

    x_bytes = jnp.dtype(w_dtype).itemsize   # x is cast to the weight dtype
    o_bytes = jnp.dtype(x_dtype).itemsize
    w_bytes = jnp.dtype(w_dtype).itemsize
    floor = _sublane_floor(w_dtype)

    big_vmem = vmem_cap >= 100 * 1024 * 1024   # v5e/v6e (128 MiB) vs v7x (64 MiB)
    # Weight-streaming arithmetic intensity: need tm >= ~680 (v6e), ~320 (v7x),
    # ~240 (v5e) for prefill to be MXU-bound; targets below give margin.
    tm_target = 1024 if big_vmem else 512
    ti_target = 1024 if big_vmem else 512

    ti = _largest_aligned_divisor(I, ti_target, 128)
    tm = _pick_tm(M, floor, tm_target)

    # Fit to VMEM: shrink ti first (only adds grid-step overhead), then tm
    # (hurts weight-streaming arithmetic intensity).
    while _vmem_needed(tm, ti, H, x_bytes, o_bytes, w_bytes) > budget:
        new_ti = _next_smaller_aligned_divisor(I, ti, 128)
        if new_ti < ti:
            ti = new_ti
            continue
        new_tm = max(floor, ((tm // 2) // floor) * floor)
        if new_tm < tm:
            tm = new_tm
            continue
        break   # cannot shrink further; let Mosaic try

    need = _vmem_needed(tm, ti, H, x_bytes, o_bytes, w_bytes)
    vmem_limit = int(min(vmem_cap, max(32 * 1024 * 1024, int(1.3 * need))))
    return tm, ti, vmem_limit


# --------------------------------------------------------------------------- weight prep
def prepare_gemma_mlp_params(w_gate, w_up, w_down, ti):
    """One-time weight prep (call at weight-load time, NOT per forward call).

    w_gate, w_up : [I, H]  (PyTorch nn.Linear (out, in) layout)
    w_down       : [H, I]

    Returns:
      wgu  : [I//ti, H, 2*ti]  block-major: wgu[i] is the CONTIGUOUS slab
                               [gate_tile_i | up_tile_i] streamed at step i
      wd_t : [I, H]            input-major down-proj weight (leading-dim tiles
                               are already contiguous)
    """
    I, H = w_gate.shape
    assert I % ti == 0, f"ti={ti} must divide intermediate_size={I}"
    n_i = I // ti
    wg_t = jnp.transpose(w_gate)                                   # (H, I)
    wu_t = jnp.transpose(w_up)                                     # (H, I)
    wgu = jnp.concatenate(
        [wg_t.reshape(H, n_i, ti), wu_t.reshape(H, n_i, ti)], axis=2)  # (H, n_i, 2ti)
    wgu = jnp.transpose(wgu, (1, 0, 2))                            # (n_i, H, 2*ti)
    wd_t = jnp.transpose(w_down)                                   # (I, H)
    return wgu, wd_t


# ------------------------------------------------------------------------------ wrapper
def gemma_mlp_prepared(x, wgu, wd_t, *, tm, ti, vmem_limit_bytes=None):
    """Run the fused MLP kernel with pre-fused, block-major weights.

    x    : [B, S, H]
    wgu  : [I//ti, H, 2*ti]  (from prepare_gemma_mlp_params)
    wd_t : [I, H]
    """
    B, S, H = x.shape
    I = wd_t.shape[0]
    assert I % ti == 0
    i_steps = I // ti
    assert wgu.shape == (i_steps, H, 2 * ti), (wgu.shape, (i_steps, H, 2 * ti))

    out_dtype = x.dtype
    M = B * S
    x2 = x.reshape(M, H)
    # Feed the MXU with the weight dtype (avoids mixed f32xbf16 multi-pass dots
    # and halves the x-tile DMA when weights are bf16).
    if x2.dtype != wgu.dtype:
        x2 = x2.astype(wgu.dtype)

    # Token-tail padding only when tm does not divide M (tile selection tries
    # to avoid this).  TODO(synk): masked store / BoundedSlice on the last m
    # block to drop the pad copy entirely for odd prefill lengths.
    m_steps = pl.cdiv(M, tm)
    Mp = m_steps * tm
    if Mp != M:
        x2 = jnp.pad(x2, ((0, Mp - M), (0, 0)))

    x_bytes = jnp.dtype(x2.dtype).itemsize
    o_bytes = jnp.dtype(out_dtype).itemsize
    w_bytes = jnp.dtype(wgu.dtype).itemsize

    if vmem_limit_bytes is None:
        vmem_cap = _vmem_capacity_bytes()
        need = _vmem_needed(tm, ti, H, x_bytes, o_bytes, w_bytes)
        vmem_limit_bytes = int(min(vmem_cap, max(32 * 1024 * 1024, int(1.3 * need))))

    cost = pl.CostEstimate(
        flops=6 * Mp * H * I,                        # 2*M*H*(2I) + 2*M*I*H
        transcendentals=Mp * I,                      # tanh in GELU
        bytes_accessed=(
            Mp * H * x_bytes                         # x
            + m_steps * (3 * H * I) * w_bytes        # streamed weights per m-step
            + Mp * H * o_bytes                       # output
        ),
    )

    # TODO(synk): for decode / m_steps == 1 on v7x, split the I reduction across
    # the two TensorCores (per-core partial accumulators + final add) so both
    # cores' DMA streams pull weights; the "parallel" m axis alone gives the
    # second core nothing to do when M is tiny.
    # TODO(synk): sweep pipeline_mode=pl.Buffered(3) on the weight specs for the
    # memory-bound decode regime on v7x when the VMEM budget allows.
    out2 = pl.pallas_call(
        gemma_mlp_kernel,
        out_shape=jax.ShapeDtypeStruct((Mp, H), out_dtype),
        grid_spec=pltpu.PrefetchScalarGridSpec(
            num_scalar_prefetch=0,
            grid=(m_steps, i_steps),
            in_specs=[
                pl.BlockSpec((tm, H), lambda m, i: (m, 0)),            # x tile
                pl.BlockSpec((None, H, 2 * ti), lambda m, i: (i, 0, 0)),  # contiguous wgu tile
                pl.BlockSpec((ti, H), lambda m, i: (i, 0)),            # down-proj tile
            ],
            out_specs=pl.BlockSpec((tm, H), lambda m, i: (m, 0)),      # resident across i
            scratch_shapes=[pltpu.VMEM((tm, H), jnp.float32)],
        ),
        compiler_params=pltpu.CompilerParams(
            dimension_semantics=("parallel", "arbitrary"),
            vmem_limit_bytes=vmem_limit_bytes,
        ),
        cost_estimate=cost,
    )(x2, wgu, wd_t)

    if Mp != M:
        out2 = out2[:M]
    return out2.reshape(B, S, H)


def gemma_mlp(x, w_gate, w_up, w_down, *, tm=None, ti=None):
    """Convenience wrapper: picks generation-aware tiles, fuses weights, runs.

    x: [B, S, H]; w_gate/w_up: [I, H]; w_down: [H, I] (PyTorch nn.Linear layout).
    In a real model call prepare_gemma_mlp_params() once and reuse the result.
    """
    B, S, H = x.shape
    I = w_gate.shape[0]
    M = B * S

    auto_tm, auto_ti, vmem_limit = select_gemma_mlp_tiles(
        M, H, I, x.dtype, w_gate.dtype)
    if tm is None:
        tm = auto_tm
    if ti is None:
        ti = auto_ti

    wgu, wd_t = prepare_gemma_mlp_params(w_gate, w_up, w_down, ti)
    return gemma_mlp_prepared(x, wgu, wd_t, tm=tm, ti=ti,
                              vmem_limit_bytes=vmem_limit)


# -------------------------------------------------------------------------- reference
def gemma_mlp_ref(x, w_gate, w_up, w_down):
    gate = jnp.einsum("bsh,ih->bsi", x, w_gate)
    up = jnp.einsum("bsh,ih->bsi", x, w_up)
    h = _gelu_tanh(gate) * up
    return jnp.einsum("bsi,hi->bsh", h, w_down)


if __name__ == "__main__":
    # Small shapes consistent with the module: hidden_size=128, intermediate=256.
    B, S, H, I = 2, 16, 128, 256

    key = jax.random.PRNGKey(0)
    kx, kg, ku, kd = jax.random.split(key, 4)

    x = jax.random.normal(kx, (B, S, H), dtype=jnp.float32)
    # nn.Linear weight shapes: (out_features, in_features), bias=False.
    w_gate = jax.random.normal(kg, (I, H), dtype=jnp.float32) * 0.02
    w_up = jax.random.normal(ku, (I, H), dtype=jnp.float32) * 0.02
    w_down = jax.random.normal(kd, (H, I), dtype=jnp.float32) * 0.02

    ref = gemma_mlp_ref(x, w_gate, w_up, w_down)

    # 1) Explicit small tiles: grid (2, 2) exercises the streamed-weight
    #    pipeline, the block-major wgu layout, and accumulator init/finalize.
    out = gemma_mlp(x, w_gate, w_up, w_down, tm=16, ti=128)
    out = jax.block_until_ready(out)
    assert out.shape == (B, S, H)
    assert jnp.allclose(out, ref, atol=1e-4, rtol=1e-4), (
        float(jnp.max(jnp.abs(out - ref))))

    # 2) Auto (generation-aware) tile selection path.
    out_auto = gemma_mlp(x, w_gate, w_up, w_down)
    out_auto = jax.block_until_ready(out_auto)
    assert jnp.allclose(out_auto, ref, atol=1e-4, rtol=1e-4), (
        float(jnp.max(jnp.abs(out_auto - ref))))

    print("KERNEL_OK")
</pallas_src>

<mosaic_0001>
module attributes {stable_mosaic.version = 11 : i64} {
  func.func @gemma_mlp_kernel(%arg0: i32, %arg1: i32, %arg2: memref<16x128xf32, #tpu.memory_space<vmem>>, %arg3: memref<1x128x256xf32, #tpu.memory_space<vmem>>, %arg4: memref<128x128xf32, #tpu.memory_space<vmem>>, %arg5: memref<16x128xf32, #tpu.memory_space<vmem>>, %arg6: memref<16x128xf32, #tpu.memory_space<vmem>>) attributes {dimension_semantics = [#tpu.dimension_semantics<parallel>, #tpu.dimension_semantics<arbitrary>], iteration_bounds = array<i64: 2, 2>, scalar_prefetch = 0 : i64, scratch_operands = 1 : i64, tpu.core_type = #tpu.core_type<tc>, window_params = [{transform_indices = @transform_0, window_bounds = array<i64: 16, 128>}, {transform_indices = @transform_1, window_bounds = array<i64: 1, 128, 256>}, {transform_indices = @transform_2, window_bounds = array<i64: 128, 128>}, {transform_indices = @transform_3, window_bounds = array<i64: 16, 128>}]} {
    %c0_i32 = arith.constant 0 : i32
    %0 = arith.cmpi eq, %arg1, %c0_i32 : i32
    %1 = arith.extui %0 : i1 to i32
    %c0_i32_0 = arith.constant 0 : i32
    %2 = arith.cmpi ne, %1, %c0_i32_0 : i32
    scf.if %2 {
      %cst_17 = arith.constant 0.000000e+00 : f32
      %31 = vector.broadcast %cst_17 : f32 to vector<16x128xf32>
      %c0_18 = arith.constant 0 : index
      %c0_19 = arith.constant 0 : index
      %32 = vector.load %arg6[%c0_18, %c0_19] : memref<16x128xf32, #tpu.memory_space<vmem>>, vector<16x128xf32>
      tpu.vector_store %arg6[%c0_18, %c0_19], %31 {strides = array<i32>} : memref<16x128xf32, #tpu.memory_space<vmem>>, vector<16x128xf32>,
    } else {
    }
    %c0 = arith.constant 0 : index
    %c0_1 = arith.constant 0 : index
    %3 = vector.load %arg2[%c0, %c0_1] : memref<16x128xf32, #tpu.memory_space<vmem>>, vector<16x128xf32>
    %c0_2 = arith.constant 0 : index
    %c0_3 = arith.constant 0 : index
    %c0_4 = arith.constant 0 : index
    %4 = vector.load %arg3[%c0_2, %c0_3, %c0_4] : memref<1x128x256xf32, #tpu.memory_space<vmem>>, vector<1x128x256xf32>
    %5 = vector.shape_cast %4 : vector<1x128x256xf32> to vector<128x256xf32>
    %cst = arith.constant dense<0.000000e+00> : vector<16x256xf32>
    %6 = tpu.matmul %3, %5, %cst {dimension_numbers = #tpu.dot_dimension_numbers<[1], [0], [0], [1], [0, 0, 1, 1], [], []>} : vector<16x128xf32>, vector<128x256xf32>, vector<16x256xf32> -> vector<16x256xf32>
    %7 = vector.extract_strided_slice %6 {offsets = [0, 0], sizes = [16, 128], strides = [1, 1]} : vector<16x256xf32> to vector<16x128xf32>
    %8 = vector.extract_strided_slice %6 {offsets = [0, 128], sizes = [16, 128], strides = [1, 1]} : vector<16x256xf32> to vector<16x128xf32>
    %cst_5 = arith.constant 5.000000e-01 : f32
    %9 = vector.broadcast %cst_5 : f32 to vector<16x128xf32>
    %10 = arith.mulf %9, %7 : vector<16x128xf32>
    %cst_6 = arith.constant 4.471500e-02 : f32
    %11 = vector.broadcast %cst_6 : f32 to vector<16x128xf32>
    %12 = arith.mulf %11, %7 : vector<16x128xf32>
    %13 = arith.mulf %12, %7 : vector<16x128xf32>
    %14 = arith.mulf %13, %7 : vector<16x128xf32>
    %15 = arith.addf %7, %14 : vector<16x128xf32>
    %cst_7 = arith.constant 0.797884583 : f32
    %16 = vector.broadcast %cst_7 : f32 to vector<16x128xf32>
    %17 = arith.mulf %16, %15 : vector<16x128xf32>
    %18 = math.tanh %17 : vector<16x128xf32>
    %cst_8 = arith.constant 1.000000e+00 : f32
    %19 = vector.broadcast %cst_8 : f32 to vector<16x128xf32>
    %20 = arith.addf %19, %18 : vector<16x128xf32>
    %21 = arith.mulf %10, %20 : vector<16x128xf32>
    %22 = arith.mulf %21, %8 : vector<16x128xf32>
    %c0_9 = arith.constant 0 : index
    %c0_10 = arith.constant 0 : index
    %23 = vector.load %arg6[%c0_9, %c0_10] : memref<16x128xf32, #tpu.memory_space<vmem>>, vector<16x128xf32>
    %c0_11 = arith.constant 0 : index
    %c0_12 = arith.constant 0 : index
    %24 = vector.load %arg4[%c0_11, %c0_12] : memref<128x128xf32, #tpu.memory_space<vmem>>, vector<128x128xf32>
    %cst_13 = arith.constant dense<0.000000e+00> : vector<16x128xf32>
    %25 = tpu.matmul %22, %24, %cst_13 {dimension_numbers = #tpu.dot_dimension_numbers<[1], [0], [0], [1], [0, 0, 1, 1], [], []>} : vector<16x128xf32>, vector<128x128xf32>, vector<16x128xf32> -> vector<16x128xf32>
    %26 = arith.addf %23, %25 : vector<16x128xf32>
    %c0_14 = arith.constant 0 : index
    %c0_15 = arith.constant 0 : index
    %27 = vector.load %arg6[%c0_14, %c0_15] : memref<16x128xf32, #tpu.memory_space<vmem>>, vector<16x128xf32>
    tpu.vector_store %arg6[%c0_14, %c0_15], %26 {strides = array<i32>} : memref<16x128xf32, #tpu.memory_space<vmem>>, vector<16x128xf32>,
    %c1_i32 = arith.constant 1 : i32
    %28 = arith.cmpi eq, %arg1, %c1_i32 : i32
    %29 = arith.extui %28 : i1 to i32
    %c0_i32_16 = arith.constant 0 : i32
    %30 = arith.cmpi ne, %29, %c0_i32_16 : i32
    scf.if %30 {
      %c0_17 = arith.constant 0 : index
      %c0_18 = arith.constant 0 : index
      %31 = vector.load %arg6[%c0_17, %c0_18] : memref<16x128xf32, #tpu.memory_space<vmem>>, vector<16x128xf32>
      %c0_19 = arith.constant 0 : index
      %c0_20 = arith.constant 0 : index
      %32 = vector.load %arg5[%c0_19, %c0_20] : memref<16x128xf32, #tpu.memory_space<vmem>>, vector<16x128xf32>
      tpu.vector_store %arg5[%c0_19, %c0_20], %31 {strides = array<i32>} : memref<16x128xf32, #tpu.memory_space<vmem>>, vector<16x128xf32>,
    } else {
    }
    return
  }
  func.func @transform_0(%arg0: i32, %arg1: i32) -> (i32, i32) {
    %c0_i32 = arith.constant 0 : i32
    %c0_i32_0 = arith.constant 0 : i32
    return %arg0, %c0_i32 : i32, i32
  }
  func.func @transform_1(%arg0: i32, %arg1: i32) -> (i32, i32, i32) {
    %c0_i32 = arith.constant 0 : i32
    %c0_i32_0 = arith.constant 0 : i32
    %c0_i32_1 = arith.constant 0 : i32
    return %arg1, %c0_i32, %c0_i32_0 : i32, i32, i32
  }
  func.func @transform_2(%arg0: i32, %arg1: i32) -> (i32, i32) {
    %c0_i32 = arith.constant 0 : i32
    %c0_i32_0 = arith.constant 0 : i32
    return %arg1, %c0_i32 : i32, i32
  }
  func.func @transform_3(%arg0: i32, %arg1: i32) -> (i32, i32) {
    %c0_i32 = arith.constant 0 : i32
    %c0_i32_0 = arith.constant 0 : i32
    return %arg0, %c0_i32 : i32, i32
  }
}

</mosaic_0001>

<llo_original>
// kernel: tpu_custom_call.1
$region0: #{tpu_custom_call.1}
  #allocation0 [shape = 'u32[]', space=smem, size = 0x4, offset = 0x4, fixed_abs, tag = 'smem constant byte address 0x4 - core index']
  #allocation1 [shape = 'u32[144,128]{1,0:T(1,128)}', space=vmem, size = 0x12000, scoped, tag = 'internal scratch']
  #allocation2 [shape = 'f32[16,128]{1,0:T(8,128)}', space=vmem, size = 0x2000, scoped, tag = 'scratch operand']
  %s0 = inlined_call_operand.hbm [shape: f32[32,128], index: 0, kind: input, shape index: {}]
  %s1 = inlined_call_operand.hbm [shape: f32[2,128,256], index: 1, kind: input, shape index: {}]
  %s2 = inlined_call_operand.hbm [shape: f32[256,128], index: 2, kind: input, shape index: {}]
  %s3 = inlined_call_operand.hbm [shape: f32[32,128], index: 3, kind: output, shape index: {}]
  %s4 = sld [smem:[#allocation0]]
  $region65: #{tpu_custom_call.1} parent=0
    _
  %s6 = ssub.s32 1, %s4
  %s7 = scalar_select 0, %s6, %s4
  $region1: #{tpu_custom_call.1} parent=0
    #allocation3 [shape = 'u8[16384]{0}', space=vmem, size = 0x4000, scoped, tag = 'input window, operand 0']
    #allocation4 [shape = 's32[2]{0}', space=sflag, size = 0x8, scoped, tag = 'scoped memory for tpu_custom_call.1']
    #allocation5 [shape = 's32[2]{0}', space=sflag, size = 0x8, scoped, tag = 'scoped memory for tpu_custom_call.1']
    #allocation6 [shape = 'u8[262144]{0}', space=vmem, size = 0x40000, scoped, tag = 'input window, operand 1']
    #allocation7 [shape = 's32[2]{0}', space=sflag, size = 0x8, scoped, tag = 'scoped memory for tpu_custom_call.1']
    #allocation8 [shape = 'u8[131072]{0}', space=vmem, size = 0x20000, scoped, tag = 'input window, operand 2']
    #allocation9 [shape = 'u8[16384]{0}', space=vmem, size = 0x4000, scoped, tag = 'output window, operand 0']
    %8 = vsyncpa [#allocation4], 0
    %s9 = scalar_lea.sflag [#allocation4], 1
    %10 = vsyncpa %s9, 0
    %11 = vsyncpa [#allocation7], 0
    %s12 = scalar_lea.sflag [#allocation7], 1
    %13 = vsyncpa %s12, 0
    %14 = vsyncpa [#allocation5], 0
    %s15 = scalar_lea.sflag [#allocation5], 1
    %16 = vsyncpa %s15, 0
    loop: start=0, step=1, limit=6
    $region2: #{tpu_custom_call.1} parent=1 // loop_pre_header
      _
    $region3: #{tpu_custom_call.1} parent=1 // loop_header
      %s18 = sphi 0, %s22
      %p19 = scmp.ge.s32.totalorder %s18, 6
      %s25 = sphi 0, %s37
      %s26 = sphi 0, %s33
      %s27 = sphi 0, %s25
      %s28 = sphi 0, %s26
      %s29 = sphi 0, %s27
      %s30 = sphi 0, %s28
      %s40 = sphi 0, %s42
      %s43 = sphi 0, %s40
      %s44 = sphi 0, %s43
      %s60 = sphi 0, %s44
      %s66 = sphi 0, %s68
      %s69 = sphi 0, %s66
      %s70 = sphi 0, %s69
      %s86 = sphi 0, %s70
      %s92 = sphi 0, %s94
      %s95 = sphi 0, %s92
      %s96 = sphi 0, %s95
      %s112 = sphi 0, %s96
      %s118 = sphi 0, %s120
      %s121 = sphi 0, %s118
      %s122 = sphi 0, %s121
      %s138 = sphi 0, %s122
    $region4: #{tpu_custom_call.1} parent=1 // loop_header_branch
      %21 = sbr.rel (%p19) target = $region8
    $region5: #{tpu_custom_call.1} parent=1 // loop_body
      %s23 = ssub.s32 %s18, 1
      %s24 = ssub.s32 %s18, 2
      %s31 = sadd.s32 1, %s26
      %p32 = scmp.ge.s32.totalorder %s31, 2
      %s33 = scalar_select %p32, 0, %s31
      %s34 = sadd.s32 1, %s25
      %s35 = scalar_select %p32, %s34, %s25
      %p36 = scmp.ge.s32.totalorder %s35, 2
      %s37 = scalar_select %p36, 0, %s35
      %s38 = ssub.s32 %s25, %s37
      %p39 = scmp.eq.s32.totalorder %s38, 0
      %s41 = sadd.s32 %s40, 1
      %s42 = scalar_select %p39, %s40, %s41
      %p45 = pneg %p39
      %p46 = scmp.eq.s32.totalorder %s18, 3
      %p47 = por %p45, %p46
      %p48 = scmp.ne.s32.totalorder %s40, %s43
      %p49 = scmp.eq.s32.totalorder %s18, 0
      %p50 = por %p48, %p49
      %p51 = scmp.ne.s32.totalorder %s40, %s43
      %p52 = scmp.eq.s32.totalorder %s23, 3
      %p53 = por %p51, %p52
      %p54 = scmp.ne.s32.totalorder %s43, %s44
      %p55 = scmp.eq.s32.totalorder %s23, 0
      %p56 = por %p54, %p55
      %p57 = scmp.ne.s32.totalorder %s43, %s44
      %p58 = scmp.eq.s32.totalorder %s24, 3
      %p59 = por %p57, %p58
      %p61 = scmp.ne.s32.totalorder %s44, %s60
      %p62 = scmp.eq.s32.totalorder %s24, 0
      %p63 = por %p61, %p62
      %s64 = ssub.s32 %s26, %s33
      %p65 = scmp.eq.s32.totalorder %s64, 0
      %s67 = sadd.s32 %s66, 1
      %s68 = scalar_select %p65, %s66, %s67
      %p71 = pneg %p65
      %p72 = scmp.eq.s32.totalorder %s18, 3
      %p73 = por %p71, %p72
      %p74 = scmp.ne.s32.totalorder %s66, %s69
      %p75 = scmp.eq.s32.totalorder %s18, 0
      %p76 = por %p74, %p75
      %p77 = scmp.ne.s32.totalorder %s66, %s69
      %p78 = scmp.eq.s32.totalorder %s23, 3
      %p79 = por %p77, %p78
      %p80 = scmp.ne.s32.totalorder %s69, %s70
      %p81 = scmp.eq.s32.totalorder %s23, 0
      %p82 = por %p80, %p81
      %p83 = scmp.ne.s32.totalorder %s69, %s70
      %p84 = scmp.eq.s32.totalorder %s24, 3
      %p85 = por %p83, %p84
      %p87 = scmp.ne.s32.totalorder %s70, %s86
      %p88 = scmp.eq.s32.totalorder %s24, 0
      %p89 = por %p87, %p88
      %s90 = ssub.s32 %s26, %s33
      %p91 = scmp.eq.s32.totalorder %s90, 0
      %s93 = sadd.s32 %s92, 1
      %s94 = scalar_select %p91, %s92, %s93
      %p97 = pneg %p91
      %p98 = scmp.eq.s32.totalorder %s18, 3
      %p99 = por %p97, %p98
      %p100 = scmp.ne.s32.totalorder %s92, %s95
      %p101 = scmp.eq.s32.totalorder %s18, 0
      %p102 = por %p100, %p101
      %p103 = scmp.ne.s32.totalorder %s92, %s95
      %p104 = scmp.eq.s32.totalorder %s23, 3
      %p105 = por %p103, %p104
      %p106 = scmp.ne.s32.totalorder %s95, %s96
      %p107 = scmp.eq.s32.totalorder %s23, 0
      %p108 = por %p106, %p107
      %p109 = scmp.ne.s32.totalorder %s95, %s96
      %p110 = scmp.eq.s32.totalorder %s24, 3
      %p111 = por %p109, %p110
      %p113 = scmp.ne.s32.totalorder %s96, %s112
      %p114 = scmp.eq.s32.totalorder %s24, 0
      %p115 = por %p113, %p114
      %s116 = ssub.s32 %s25, %s37
      %p117 = scmp.eq.s32.totalorder %s116, 0
      %s119 = sadd.s32 %s118, 1
      %s120 = scalar_select %p117, %s118, %s119
      %p123 = pneg %p117
      %p124 = scmp.eq.s32.totalorder %s18, 3
      %p125 = por %p123, %p124
      %p126 = scmp.ne.s32.totalorder %s118, %s121
      %p127 = scmp.eq.s32.totalorder %s18, 0
      %p128 = por %p126, %p127
      %p129 = scmp.ne.s32.totalorder %s118, %s121
      %p130 = scmp.eq.s32.totalorder %s23, 3
      %p131 = por %p129, %p130
      %p132 = scmp.ne.s32.totalorder %s121, %s122
      %p133 = scmp.eq.s32.totalorder %s23, 0
      %p134 = por %p132, %p133
      %p135 = scmp.ne.s32.totalorder %s121, %s122
      %p136 = scmp.eq.s32.totalorder %s24, 3
      %p137 = por %p135, %p136
      %p139 = scmp.ne.s32.totalorder %s122, %s138
      %p140 = scmp.eq.s32.totalorder %s24, 0
      %p141 = por %p139, %p140
      %p142 = scmp.le.s32.totalorder 1, %s18
      %p143 = scmp.lt.s32.totalorder %s18, 5
      %p144 = pnand %p142, %p143
      %p145 = pneg %p144
      // Predicated region
      $region9: #{tpu_custom_call.1} parent=5 // pred_check
        _
      $region10: #{tpu_custom_call.1} parent=5 // pred_check_branch
        %147 = sbr.rel (%p144) target = $region12
      $region11: #{tpu_custom_call.1} parent=5 // pred_region
        %s148 = ssub.s32 %s18, 1
      $region12: #{tpu_custom_call.1} parent=5 // pred_fallthru
        _
      %p149 = scmp.lt.s32.totalorder %s18, 4
      // Predicated region
      $region13: #{tpu_custom_call.1} parent=5 // pred_check
        %p150 = pneg %p149
      $region14: #{tpu_custom_call.1} parent=5 // pred_check_branch
        %152 = sbr.rel (%p150) target = $region16
      $region15: #{tpu_custom_call.1} parent=5 // pred_region
        // Predicated region
        $region17: #{tpu_custom_call.1} parent=15 // pred_check
          %p153 = pneg %p50
        $region18: #{tpu_custom_call.1} parent=15 // pred_check_branch
          %155 = sbr.rel (%p153) target = $region20
        $region19: #{tpu_custom_call.1} parent=15 // pred_region
          %s156 = sand.u32 %s40, 1
          %s157 = scalar_lea.sflag [#allocation4], %s156
          %s158 = sand.u32 %s40, 1
          %s159 = smul.addr %s158, 16
          %s160 = scalar_lea.vmem [#allocation3], %s159
          %s161 = smul.u32 2, %s25
          %s163 = ssub.s32 256, 256
          %164 = vsyncadd %s157, %s163
          %s165 = smul.addr %s161, 128
          %s166 = scalar_lea.hbm %s0, %s165
          %s167 = sshll.u32 %s160, 4
          %s168 = int_to_ptr.vmem [resolvable:$true] %s167
          %173 = dma.hbm_to_vmem [thread:$0]  %s166, 256, %s168, %s157, 128, 128, 8
        $region20: #{tpu_custom_call.1} parent=15 // pred_fallthru
          _
        // Predicated region
        $region21: #{tpu_custom_call.1} parent=15 // pred_check
          %p174 = pneg %p76
        $region22: #{tpu_custom_call.1} parent=15 // pred_check_branch
          %176 = sbr.rel (%p174) target = $region24
        $region23: #{tpu_custom_call.1} parent=15 // pred_region
          %s177 = sand.u32 %s18, 1
          %s178 = scalar_lea.sflag [#allocation7], %s177
          %s179 = sand.u32 %s66, 1
          %s180 = smul.addr %s179, 256
          %s181 = scalar_lea.vmem [#allocation6], %s180
          %s183 = ssub.s32 4096, 4096
          %184 = vsyncadd %s178, %s183
          %s185 = smul.addr %s26, 32
          %s186 = smul.addr %s185, 128
          %s187 = scalar_lea.hbm %s1, %s186
          %s188 = sshll.u32 %s181, 4
          %s189 = int_to_ptr.vmem [resolvable:$true] %s188
          %194 = dma.hbm_to_vmem [thread:$0]  %s187, 4096, %s189, %s178, 256, 256, 16
        $region24: #{tpu_custom_call.1} parent=15 // pred_fallthru
          _
        // Predicated region
        $region25: #{tpu_custom_call.1} parent=15 // pred_check
          %p195 = pneg %p102
        $region26: #{tpu_custom_call.1} parent=15 // pred_check_branch
          %197 = sbr.rel (%p195) target = $region28
        $region27: #{tpu_custom_call.1} parent=15 // pred_region
          %s198 = sand.u32 %s18, 1
          %s199 = scalar_lea.sflag [#allocation7], %s198
          %s200 = sand.u32 %s92, 1
          %s201 = smul.addr %s200, 128
          %s202 = scalar_lea.vmem [#allocation8], %s201
          %s203 = smul.u32 16, %s26
          %s205 = ssub.s32 2048, 2048
          %206 = vsyncadd %s199, %s205
          %s207 = smul.addr %s203, 128
          %s208 = scalar_lea.hbm %s2, %s207
          %s209 = sshll.u32 %s202, 4
          %s210 = int_to_ptr.vmem [resolvable:$true] %s209
          %215 = dma.hbm_to_vmem [thread:$0]  %s208, 2048, %s210, %s199, 128, 128, 8
        $region28: #{tpu_custom_call.1} parent=15 // pred_fallthru
          _
      $region16: #{tpu_custom_call.1} parent=5 // pred_fallthru
        _
      %p216 = scmp.le.s32.totalorder 1, %s18
      %p217 = scmp.lt.s32.totalorder %s18, 5
      %p218 = pnand %p216, %p217
      %p219 = pneg %p218
      // Predicated region
      $region29: #{tpu_custom_call.1} parent=5 // pred_check
        _
      $region30: #{tpu_custom_call.1} parent=5 // pred_check_branch
        %221 = sbr.rel (%p218) target = $region32
      $region31: #{tpu_custom_call.1} parent=5 // pred_region
        %s222 = ssub.s32 %s18, 1
        %s223 = sand.u32 %s43, 1
        %s224 = scalar_lea.sflag [#allocation4], %s223
        %s225 = sand.u32 %s43, 1
        %s226 = smul.addr %s225, 16
        %s227 = scalar_lea.vmem [#allocation3], %s226
        // Predicated region
        $region33: #{tpu_custom_call.1} parent=31 // pred_check
          %p228 = pneg %p56
        $region34: #{tpu_custom_call.1} parent=31 // pred_check_branch
          %230 = sbr.rel (%p228) target = $region36
        $region35: #{tpu_custom_call.1} parent=31 // pred_region
          %231 = dma.done %s224, 256
        $region36: #{tpu_custom_call.1} parent=31 // pred_fallthru
          _
        %s232 = sand.u32 %s23, 1
        %s233 = scalar_lea.sflag [#allocation7], %s232
        %s234 = sand.u32 %s69, 1
        %s235 = smul.addr %s234, 256
        %s236 = scalar_lea.vmem [#allocation6], %s235
        // Predicated region
        $region37: #{tpu_custom_call.1} parent=31 // pred_check
          %p237 = pneg %p82
        $region38: #{tpu_custom_call.1} parent=31 // pred_check_branch
          %239 = sbr.rel (%p237) target = $region40
        $region39: #{tpu_custom_call.1} parent=31 // pred_region
          %240 = dma.done %s233, 4096
        $region40: #{tpu_custom_call.1} parent=31 // pred_fallthru
          _
        %s241 = sand.u32 %s23, 1
        %s242 = scalar_lea.sflag [#allocation7], %s241
        %s243 = sand.u32 %s95, 1
        %s244 = smul.addr %s243, 128
        %s245 = scalar_lea.vmem [#allocation8], %s244
        // Predicated region
        $region41: #{tpu_custom_call.1} parent=31 // pred_check
          %p246 = pneg %p108
        $region42: #{tpu_custom_call.1} parent=31 // pred_check_branch
          %248 = sbr.rel (%p246) target = $region44
        $region43: #{tpu_custom_call.1} parent=31 // pred_region
          %249 = dma.done %s242, 2048
        $region44: #{tpu_custom_call.1} parent=31 // pred_fallthru
          _
        %s250 = sand.u32 %s43, 1
        %s251 = scalar_lea.sflag [#allocation4], %s250
        %s252 = sand.u32 %s43, 1
        %s253 = smul.addr %s252, 16
        %s254 = scalar_lea.vmem [#allocation3], %s253
        %p255 = pneg %p56
        %p256 = pneg %p53
        %s257 = sand.u32 %s23, 1
        %s258 = scalar_lea.sflag [#allocation7], %s257
        %s259 = sand.u32 %s69, 1
        %s260 = smul.addr %s259, 256
        %s261 = scalar_lea.vmem [#allocation6], %s260
        %p262 = pneg %p82
        %p263 = pneg %p79
        %s264 = sand.u32 %s23, 1
        %s265 = scalar_lea.sflag [#allocation7], %s264
        %s266 = sand.u32 %s95, 1
        %s267 = smul.addr %s266, 128
        %s268 = scalar_lea.vmem [#allocation8], %s267
        %p269 = pneg %p108
        %p270 = pneg %p105
        %p271 = pneg %p134
        %p272 = pneg %p131
        %s273 = sand.u32 %s121, 1
        %s274 = scalar_lea.sflag [#allocation5], %s273
        %s275 = sand.u32 %s121, 1
        %s276 = smul.addr %s275, 16
        %s277 = scalar_lea.vmem [#allocation9], %s276
        %s278 = smul.u32 2, %s27
        %s279 = smul.u32 16, %s28
        %s280 = smul.u32 2, %s27
        %p281 = scmp.eq.s32.totalorder %s28, 0
        // Predicated region
        $region45: #{tpu_custom_call.1} parent=31 // pred_check
          %p282 = pneg %p281
        $region46: #{tpu_custom_call.1} parent=31 // pred_check_branch
          %284 = sbr.rel (%p282) target = $region48
        $region47: #{tpu_custom_call.1} parent=31 // pred_region
          %285 = vst [vmem:[#allocation2] sm:$0xff] 0.0
          %286 = vst [vmem:[#allocation2 + $0x8] sm:$0xff] 0.0
        $region48: #{tpu_custom_call.1} parent=31 // pred_fallthru
          _
        %v287 = vld [vmem:[%s227] sm:$0xff]
        %v288 = vld [vmem:[%s227 + $0x8] sm:$0xff]
        %v289 = vld [vmem:[%s236] sm:$0xff]
        %v290 = vld [vmem:[%s236 + $0x8] sm:$0xff]
        %v291 = vld [vmem:[%s236 + $0x10] sm:$0xff]
        %v292 = vld [vmem:[%s236 + $0x18] sm:$0xff]
        %v293 = vld [vmem:[%s236 + $0x20] sm:$0xff]
        %v294 = vld [vmem:[%s236 + $0x28] sm:$0xff]
        %v295 = vld [vmem:[%s236 + $0x30] sm:$0xff]
        %v296 = vld [vmem:[%s236 + $0x38] sm:$0xff]
        %v297 = vld [vmem:[%s236 + $0x40] sm:$0xff]
        %v298 = vld [vmem:[%s236 + $0x48] sm:$0xff]
        %v299 = vld [vmem:[%s236 + $0x50] sm:$0xff]
        %v300 = vld [vmem:[%s236 + $0x58] sm:$0xff]
        %v301 = vld [vmem:[%s236 + $0x60] sm:$0xff]
        %v302 = vld [vmem:[%s236 + $0x68] sm:$0xff]
        %v303 = vld [vmem:[%s236 + $0x70] sm:$0xff]
        %v304 = vld [vmem:[%s236 + $0x78] sm:$0xff]
        %v305 = vld [vmem:[%s236 + $0x80] sm:$0xff]
        %v306 = vld [vmem:[%s236 + $0x88] sm:$0xff]
        %v307 = vld [vmem:[%s236 + $0x90] sm:$0xff]
        %v308 = vld [vmem:[%s236 + $0x98] sm:$0xff]
        %v309 = vld [vmem:[%s236 + $0xa0] sm:$0xff]
        %v310 = vld [vmem:[%s236 + $0xa8] sm:$0xff]
        %v311 = vld [vmem:[%s236 + $0xb0] sm:$0xff]
        %v312 = vld [vmem:[%s236 + $0xb8] sm:$0xff]
        %v313 = vld [vmem:[%s236 + $0xc0] sm:$0xff]
        %v314 = vld [vmem:[%s236 + $0xc8] sm:$0xff]
        %v315 = vld [vmem:[%s236 + $0xd0] sm:$0xff]
        %v316 = vld [vmem:[%s236 + $0xd8] sm:$0xff]
        %v317 = vld [vmem:[%s236 + $0xe0] sm:$0xff]
        %v318 = vld [vmem:[%s236 + $0xe8] sm:$0xff]
        %v319 = vld [vmem:[%s236 + $0xf0] sm:$0xff]
        %v320 = vld [vmem:[%s236 + $0xf8] sm:$0xff]
        %321 = vmatprep.subr.mxu0 %v290
        %322 = vmatpush1.msra.mxu0 %v289
        %323 = vmatprep.subr.mxu0 %v292
        %324 = vmatpush1.msra.mxu0 %v291
        %325 = vmatprep.subr.mxu0 %v294
        %326 = vmatpush1.msra.mxu0 %v293
        %327 = vmatprep.subr.mxu0 %v296
        %328 = vmatpush1.msra.mxu0 %v295
        %329 = vmatprep.subr.mxu0 %v298
        %330 = vmatpush1.msra.mxu0 %v297
        %331 = vmatprep.subr.mxu0 %v300
        %332 = vmatpush1.msra.mxu0 %v299
        %333 = vmatprep.subr.mxu0 %v302
        %334 = vmatpush1.msra.mxu0 %v301
        %335 = vmatprep.subr.mxu0 %v304
        %336 = vmatpush1.msra.mxu0 %v303
        %337 = vmatprep.subr.mxu0 %v306
        %338 = vmatpush1.msra.mxu0 %v305
        %339 = vmatprep.subr.mxu0 %v308
        %340 = vmatpush1.msra.mxu0 %v307
        %341 = vmatprep.subr.mxu0 %v310
        %342 = vmatpush1.msra.mxu0 %v309
        %343 = vmatprep.subr.mxu0 %v312
        %344 = vmatpush1.msra.mxu0 %v311
        %345 = vmatprep.subr.mxu0 %v314
        %346 = vmatpush1.msra.mxu0 %v313
        %347 = vmatprep.subr.mxu0 %v316
        %348 = vmatpush1.msra.mxu0 %v315
        %349 = vmatprep.subr.mxu0 %v318
        %350 = vmatpush1.msra.mxu0 %v317
        %351 = vmatprep.subr.mxu0 %v320
        %352 = vmatpush1.msra.mxu0 %v319
        %353 = vmatprep.subr.mxu0 0.0
        %354 = vmatpush1.msra.mxu0 0.0
        %355 = vmatprep.subr.mxu0 0.0
        %356 = vmatpush1.msra.mxu0 0.0
        %357 = vmatprep.subr.mxu0 0.0
        %358 = vmatpush1.msra.mxu0 0.0
        %359 = vmatprep.subr.mxu0 0.0
        %360 = vmatpush1.msra.mxu0 0.0
        %361 = vmatprep.subr.mxu0 0.0
        %362 = vmatpush1.msra.mxu0 0.0
        %363 = vmatprep.subr.mxu0 0.0
        %364 = vmatpush1.msra.mxu0 0.0
        %365 = vmatprep.subr.mxu0 0.0
        %366 = vmatpush1.msra.mxu0 0.0
        %367 = vmatprep.subr.mxu0 0.0
        %368 = vmatpush1.msra.mxu0 0.0
        %369 = vmatprep.subr.mxu0 0.0
        %370 = vmatpush1.msra.mxu0 0.0
        %371 = vmatprep.subr.mxu0 0.0
        %372 = vmatpush1.msra.mxu0 0.0
        %373 = vmatprep.subr.mxu0 0.0
        %374 = vmatpush1.msra.mxu0 0.0
        %375 = vmatprep.subr.mxu0 0.0
        %376 = vmatpush1.msra.mxu0 0.0
        %377 = vmatprep.subr.mxu0 0.0
        %378 = vmatpush1.msra.mxu0 0.0
        %379 = vmatprep.subr.mxu0 0.0
        %380 = vmatpush1.msra.mxu0 0.0
        %381 = vmatprep.subr.mxu0 0.0
        %382 = vmatpush1.msra.mxu0 0.0
        %383 = vmatprep.subr.mxu0 0.0
        %384 = vmatpush1.msra.mxu0 0.0
        %385 = vmatprep.mubr.f32.mxu0 0.0
        %386 = vmatmul.mubr.f32.gmra.mrb[0].mxu0 %v287
        %v387 = vpop.f32.mrb[0].mxu0
        %v388 = vadd.f32 0.0, %v387
        %v389 = vpop.f32.mrb[0].mxu0
        %v390 = vadd.f32 0.0, %v389
        %391 = vmatprep.mubr.f32.mxu0 0.0
        %392 = vmatmul.mubr.f32.gmra.mrb[0].mxu0 %v288
        %v393 = vpop.f32.mrb[0].mxu0
        %v394 = vadd.f32 0.0, %v393
        %v395 = vpop.f32.mrb[0].mxu0
        %v396 = vadd.f32 0.0, %v395
        %397 = vdwg.mxu0
        %v398 = vmul.f32 %v388, 0.5
        %v399 = vmul.f32 %v394, 0.5
        %v400 = vmul.f32 %v388, 0.044715
        %v401 = vmul.f32 %v394, 0.044715
        %v402 = vmul.f32 %v400, %v388
        %v403 = vmul.f32 %v401, %v394
        %v404 = vmul.f32 %v402, %v388
        %v405 = vmul.f32 %v403, %v394
        %v406 = vadd.f32 %v388, %v404
        %v407 = vadd.f32 %v394, %v405
        %v408 = vmul.f32 %v406, 0.7978846
        %v409 = vmul.f32 %v407, 0.7978846
        %v410 = vtanh.pop %v408
        %v411 = vtanh.pop %v409
        %v412 = vadd.f32 %v410, 1.0
        %v413 = vadd.f32 %v411, 1.0
        %v414 = vmul.f32 %v398, %v412
        %v415 = vmul.f32 %v399, %v413
        %v416 = vmul.f32 %v414, %v390
        %v417 = vmul.f32 %v415, %v396
        %v418 = vld [vmem:[#allocation2] sm:$0xff]
        %v419 = vld [vmem:[#allocation2 + $0x8] sm:$0xff]
        %v420 = vld [vmem:[%s245] sm:$0xff]
        %v421 = vld [vmem:[%s245 + $0x8] sm:$0xff]
        %v422 = vld [vmem:[%s245 + $0x10] sm:$0xff]
        %v423 = vld [vmem:[%s245 + $0x18] sm:$0xff]
        %v424 = vld [vmem:[%s245 + $0x20] sm:$0xff]
        %v425 = vld [vmem:[%s245 + $0x28] sm:$0xff]
        %v426 = vld [vmem:[%s245 + $0x30] sm:$0xff]
        %v427 = vld [vmem:[%s245 + $0x38] sm:$0xff]
        %v428 = vld [vmem:[%s245 + $0x40] sm:$0xff]
        %v429 = vld [vmem:[%s245 + $0x48] sm:$0xff]
        %v430 = vld [vmem:[%s245 + $0x50] sm:$0xff]
        %v431 = vld [vmem:[%s245 + $0x58] sm:$0xff]
        %v432 = vld [vmem:[%s245 + $0x60] sm:$0xff]
        %v433 = vld [vmem:[%s245 + $0x68] sm:$0xff]
        %v434 = vld [vmem:[%s245 + $0x70] sm:$0xff]
        %v435 = vld [vmem:[%s245 + $0x78] sm:$0xff]
        %436 = vmatprep.subr.mxu0 0.0
        %437 = vmatpush1.msra.mxu0 %v420
        %438 = vmatprep.subr.mxu0 0.0
        %439 = vmatpush1.msra.mxu0 %v421
        %440 = vmatprep.subr.mxu0 0.0
        %441 = vmatpush1.msra.mxu0 %v422
        %442 = vmatprep.subr.mxu0 0.0
        %443 = vmatpush1.msra.mxu0 %v423
        %444 = vmatprep.subr.mxu0 0.0
        %445 = vmatpush1.msra.mxu0 %v424
        %446 = vmatprep.subr.mxu0 0.0
        %447 = vmatpush1.msra.mxu0 %v425
        %448 = vmatprep.subr.mxu0 0.0
        %449 = vmatpush1.msra.mxu0 %v426
        %450 = vmatprep.subr.mxu0 0.0
        %451 = vmatpush1.msra.mxu0 %v427
        %452 = vmatprep.subr.mxu0 0.0
        %453 = vmatpush1.msra.mxu0 %v428
        %454 = vmatprep.subr.mxu0 0.0
        %455 = vmatpush1.msra.mxu0 %v429
        %456 = vmatprep.subr.mxu0 0.0
        %457 = vmatpush1.msra.mxu0 %v430
        %458 = vmatprep.subr.mxu0 0.0
        %459 = vmatpush1.msra.mxu0 %v431
        %460 = vmatprep.subr.mxu0 0.0
        %461 = vmatpush1.msra.mxu0 %v432
        %462 = vmatprep.subr.mxu0 0.0
        %463 = vmatpush1.msra.mxu0 %v433
        %464 = vmatprep.subr.mxu0 0.0
        %465 = vmatpush1.msra.mxu0 %v434
        %466 = vmatprep.subr.mxu0 0.0
        %467 = vmatpush1.msra.mxu0 %v435
        %468 = vmatprep.subr.mxu0 0.0
        %469 = vmatpush1.msra.mxu0 0.0
        %470 = vmatprep.subr.mxu0 0.0
        %471 = vmatpush1.msra.mxu0 0.0
        %472 = vmatprep.subr.mxu0 0.0
        %473 = vmatpush1.msra.mxu0 0.0
        %474 = vmatprep.subr.mxu0 0.0
        %475 = vmatpush1.msra.mxu0 0.0
        %476 = vmatprep.subr.mxu0 0.0
        %477 = vmatpush1.msra.mxu0 0.0
        %478 = vmatprep.subr.mxu0 0.0
        %479 = vmatpush1.msra.mxu0 0.0
        %480 = vmatprep.subr.mxu0 0.0
        %481 = vmatpush1.msra.mxu0 0.0
        %482 = vmatprep.subr.mxu0 0.0
        %483 = vmatpush1.msra.mxu0 0.0
        %484 = vmatprep.subr.mxu0 0.0
        %485 = vmatpush1.msra.mxu0 0.0
        %486 = vmatprep.subr.mxu0 0.0
        %487 = vmatpush1.msra.mxu0 0.0
        %488 = vmatprep.subr.mxu0 0.0
        %489 = vmatpush1.msra.mxu0 0.0
        %490 = vmatprep.subr.mxu0 0.0
        %491 = vmatpush1.msra.mxu0 0.0
        %492 = vmatprep.subr.mxu0 0.0
        %493 = vmatpush1.msra.mxu0 0.0
        %494 = vmatprep.subr.mxu0 0.0
        %495 = vmatpush1.msra.mxu0 0.0
        %496 = vmatprep.subr.mxu0 0.0
        %497 = vmatpush1.msra.mxu0 0.0
        %498 = vmatprep.subr.mxu0 0.0
        %499 = vmatpush1.msra.mxu0 0.0
        %500 = vmatprep.mubr.f32.mxu0 0.0
        %501 = vmatmul.mubr.f32.gmra.mrb[0].mxu0 %v416
        %v502 = vpop.f32.mrb[0].mxu0
        %v503 = vadd.f32 0.0, %v502
        %v504 = vpop.f32.mrb[0].mxu0
        %505 = vmatprep.mubr.f32.mxu0 0.0
        %506 = vmatmul.mubr.f32.gmra.mrb[0].mxu0 %v417
        %v507 = vpop.f32.mrb[0].mxu0
        %v508 = vadd.f32 0.0, %v507
        %v509 = vpop.f32.mrb[0].mxu0
        %510 = vdwg.mxu0
        %v511 = vadd.f32 %v418, %v503
        %v512 = vadd.f32 %v419, %v508
        %513 = vst [vmem:[#allocation2] sm:$0xff] %v511
        %514 = vst [vmem:[#allocation2 + $0x8] sm:$0xff] %v512
        %p515 = scmp.eq.s32.totalorder %s28, 1
        // Predicated region
        $region49: #{tpu_custom_call.1} parent=31 // pred_check
          %p516 = pneg %p515
        $region50: #{tpu_custom_call.1} parent=31 // pred_check_branch
          %518 = sbr.rel (%p516) target = $region52
        $region51: #{tpu_custom_call.1} parent=31 // pred_region
          %v519 = vld [vmem:[#allocation2] sm:$0xff]
          %v520 = vld [vmem:[#allocation2 + $0x8] sm:$0xff]
          %521 = vst [vmem:[%s277] sm:$0xff] %v519
          %522 = vst [vmem:[%s277 + $0x8] sm:$0xff] %v520
        $region52: #{tpu_custom_call.1} parent=31 // pred_fallthru
          _
        %s523 = sand.u32 %s121, 1
        %s524 = scalar_lea.sflag [#allocation5], %s523
        %s525 = sand.u32 %s121, 1
        %s526 = smul.addr %s525, 16
        %s527 = scalar_lea.vmem [#allocation9], %s526
        // Predicated region
        $region53: #{tpu_custom_call.1} parent=31 // pred_check
          %p528 = pneg %p131
        $region54: #{tpu_custom_call.1} parent=31 // pred_check_branch
          %530 = sbr.rel (%p528) target = $region56
        $region55: #{tpu_custom_call.1} parent=31 // pred_region
          %s531 = smul.u32 2, %s27
          %s533 = ssub.s32 256, 256
          %534 = vsyncadd %s524, %s533
          %s535 = smul.addr %s531, 128
          %s536 = scalar_lea.hbm %s3, %s535
          %s537 = sshll.u32 %s527, 4
          %s538 = int_to_ptr.vmem [resolvable:$true] %s537
          %543 = dma.vmem_to_hbm [thread:$0]  %s538, 256, %s536, %s524, 128, 128, 8
        $region56: #{tpu_custom_call.1} parent=31 // pred_fallthru
          _
      $region32: #{tpu_custom_call.1} parent=5 // pred_fallthru
        _
      %p544 = scmp.le.s32.totalorder 2, %s18
      // Predicated region
      $region57: #{tpu_custom_call.1} parent=5 // pred_check
        %p545 = pneg %p544
      $region58: #{tpu_custom_call.1} parent=5 // pred_check_branch
        %547 = sbr.rel (%p545) target = $region60
      $region59: #{tpu_custom_call.1} parent=5 // pred_region
        %s548 = ssub.s32 %s18, 2
        // Predicated region
        $region61: #{tpu_custom_call.1} parent=59 // pred_check
          %p549 = pneg %p137
        $region62: #{tpu_custom_call.1} parent=59 // pred_check_branch
          %551 = sbr.rel (%p549) target = $region64
        $region63: #{tpu_custom_call.1} parent=59 // pred_region
          %s552 = sand.u32 %s122, 1
          %s553 = scalar_lea.sflag [#allocation5], %s552
          %s554 = sand.u32 %s122, 1
          %s555 = smul.addr %s554, 16
          %s556 = scalar_lea.vmem [#allocation9], %s555
          %557 = dma.done %s553, 256
        $region64: #{tpu_custom_call.1} parent=59 // pred_fallthru
          _
      $region60: #{tpu_custom_call.1} parent=5 // pred_fallthru
        _
    $region6: #{tpu_custom_call.1} parent=1 // loop_footer
      %s22 = sadd.s32 1, %s18
    $region7: #{tpu_custom_call.1} parent=1 // loop_footer_branch
      %17 = sbr.rel target = $region3
    $region8: #{tpu_custom_call.1} parent=1 // loop_exit
      _
    %558 = vsyncpa [#allocation4], 1
    %s559 = scalar_lea.sflag [#allocation4], 1
    %560 = vsyncpa %s559, 1
    %561 = vsyncpa [#allocation7], 1
    %s562 = scalar_lea.sflag [#allocation7], 1
    %563 = vsyncpa %s562, 1
    %564 = vsyncpa [#allocation5], 1
    %s565 = scalar_lea.sflag [#allocation5], 1
    %566 = vsyncpa %s565, 1

</llo_original>
